<compile_context>
chip_gen: v6e
topology: v6e:2x2x1
jax: 0.10.0
libtpu: 0.0.40
codegen_flags: <defaults>
</compile_context>

<pallas_src>
import functools
import math

import jax
import jax.numpy as jnp
import numpy as np
from jax.experimental import pallas as pl
from jax.experimental.pallas import tpu as pltpu

_LANE = 128
_SUBLANE = 8


def _round_up(x, m):
    return ((x + m - 1) // m) * m


def _attention_core(q, k, v, o_ref, *, block_b, seq, in_dtype):
    """q, k: (rows, dk_pad) f32 (q pre-scaled); v: (rows, dv_pad) f32."""
    rows = block_b * seq

    # scores = q @ k^T, contracting the trailing d_k axis of BOTH operands so
    # k is never transposed / relayouted before the MXU push.
    scores = jax.lax.dot_general(
        q.astype(in_dtype), k.astype(in_dtype),
        dimension_numbers=(((1,), (1,)), ((), ())),
        preferred_element_type=jnp.float32)                  # (rows, rows)

    if block_b > 1:
        # Several batch elements are stacked along the rows of one gram
        # matmul; mask cross-batch entries before the softmax (block-diagonal
        # attention).  Batch ids are built by compare+add against the static
        # block boundaries: no vector integer division required.
        r_ids = jax.lax.broadcasted_iota(jnp.int32, (rows, 1), 0)
        c_ids = jax.lax.broadcasted_iota(jnp.int32, (1, rows), 1)
        rb = jnp.zeros((rows, 1), jnp.int32)
        cb = jnp.zeros((1, rows), jnp.int32)
        for b in range(1, block_b):
            bound = jnp.int32(b * seq)
            rb = rb + (r_ids >= bound).astype(jnp.int32)
            cb = cb + (c_ids >= bound).astype(jnp.int32)
        scores = jnp.where(rb == cb, scores, jnp.float32(-1e30))

    # Numerically stable softmax, all in f32 (v5e has no bf16 VPU/EUP path).
    scores = scores - jnp.max(scores, axis=-1, keepdims=True)
    p = jnp.exp(scores)
    denom = jnp.sum(p, axis=-1, keepdims=True)               # (rows, 1)

    out = jnp.dot(p.astype(in_dtype), v.astype(in_dtype),
                  preferred_element_type=jnp.float32)        # (rows, dv_pad)
    # Exact divide: the denominator has only `rows` elements, so an approx
    # EUP reciprocal saves nothing and costs accuracy.
    o_ref[...] = (out / denom).astype(o_ref.dtype)


def _attention_kernel(xq_ref, xk_ref, xv_ref, wq_ref, wk_ref, wv_ref, o_ref,
                      *, block_b, seq, scale, mxu_dtype):
    in_dtype = mxu_dtype if mxu_dtype is not None else xq_ref.dtype
    wq = wq_ref[...].astype(in_dtype)
    wk = wk_ref[...].astype(in_dtype)
    wv = wv_ref[...].astype(in_dtype)
    xq = xq_ref[...].astype(in_dtype)
    xk = xk_ref[...].astype(in_dtype)
    xv = xv_ref[...].astype(in_dtype)

    # One MXU pass per projection over all block_b*seq rows at once.
    q = jnp.dot(xq, wq, preferred_element_type=jnp.float32)
    k = jnp.dot(xk, wk, preferred_element_type=jnp.float32)
    v = jnp.dot(xv, wv, preferred_element_type=jnp.float32)
    # Fold 1/sqrt(d_k) into q (rows*dk elems), not the (rows, rows) scores.
    q = q * jnp.float32(scale)
    _attention_core(q, k, v, o_ref, block_b=block_b, seq=seq, in_dtype=in_dtype)


def _attention_kernel_fused(x_ref, w_ref, o_ref, *, block_b, seq, dk_pad,
                            scale, mxu_dtype):
    """Self-attention path: one activation slab, one fused QKV weight."""
    in_dtype = mxu_dtype if mxu_dtype is not None else x_ref.dtype
    x = x_ref[...].astype(in_dtype)
    w = w_ref[...].astype(in_dtype)
    proj = jnp.dot(x, w, preferred_element_type=jnp.float32)  # (rows, 2dk+dv)
    # Lane-aligned (multiple-of-128) static slices: no relayout.
    q = proj[:, :dk_pad] * jnp.float32(scale)
    k = proj[:, dk_pad:2 * dk_pad]
    v = proj[:, 2 * dk_pad:]
    _attention_core(q, k, v, o_ref, block_b=block_b, seq=seq, in_dtype=in_dtype)


def single_attention(xq, xk, xv, wq, wk, wv, d_k=None, *, block_b=None,
                     mxu_dtype=jnp.bfloat16):
    """xq/xk/xv: (B, S, D); wq/wk: (D, d_k); wv: (D, d_v). Returns (B, S, d_v).

    Weights are stored transposed relative to torch.nn.Linear's (out, in)
    convention so the kernel computes x @ W directly.  mxu_dtype=None keeps
    full-f32 matmuls (accumulation and softmax are always f32).
    """
    B, S, D = xq.shape
    assert xk.shape == (B, S, D) and xv.shape == (B, S, D)
    d_k_out = wq.shape[1]
    d_v = wv.shape[1]
    assert wq.shape == (D, d_k_out) and wk.shape == (D, d_k_out)
    assert wv.shape == (D, d_v)
    if d_k is not None:
        # Softmax temperature must match the actual projection width.
        assert d_k == d_k_out, (d_k, d_k_out)
    scale = 1.0 / math.sqrt(d_k_out)

    # Pad the projection output dims to a lane multiple so every MXU result
    # and (crucially) the output store is lane-dense.  Zero columns contribute
    # 0 to QK^T and are sliced off the output.
    dk_pad = _round_up(max(d_k_out, _LANE), _LANE)
    dv_pad = _round_up(max(d_v, _LANE), _LANE)
    wq_p = jnp.pad(wq, ((0, 0), (0, dk_pad - d_k_out)))
    wk_p = jnp.pad(wk, ((0, 0), (0, dk_pad - d_k_out)))
    wv_p = jnp.pad(wv, ((0, 0), (0, dv_pad - d_v)))

    # Batch tiling: keep >= 2 grid steps whenever B allows it (double-buffered
    # DMA/compute overlap + v7x megacore sharding of the "parallel" axis),
    # while packing multiple tiny sequences per step so the MXU sees a decent
    # sublane height (target ~512 rows per step).
    if block_b is None:
        block_b = max(1, min(B, 512 // S if S < 512 else 1))
        if B >= 2:
            block_b = min(block_b, B // 2)
        while B % block_b:
            block_b -= 1
    assert B % block_b == 0, "block_b must divide B"
    rows = block_b * S
    if rows % _SUBLANE != 0 and rows != B * S:
        # Row blocks must be sublane-aligned (or span the full array).
        block_b = B
        rows = B * S
    nb = B // block_b

    # Flatten (B, S, D) -> (B*S, D) in the wrapper (free, row-major metadata
    # reshape) so the kernel stays 2-D throughout and never reshapes.
    self_attn = (xq is xk) and (xk is xv)
    xq2 = xq.reshape(B * S, D)

    act_spec = pl.BlockSpec((rows, D), lambda b: (b, 0))
    out_spec = pl.BlockSpec((rows, dv_pad), lambda b: (b, 0))

    itemsize = jnp.dtype(xq.dtype).itemsize
    n_act = 1 if self_attn else 3
    cost = pl.CostEstimate(
        flops=(2 * B * S * D * (2 * dk_pad + dv_pad)
               + 2 * B * S * rows * (dk_pad + dv_pad)),
        transcendentals=B * S * rows,
        bytes_accessed=(n_act * B * S * D + (2 * dk_pad + dv_pad) * D
                        + B * S * dv_pad) * itemsize,
    )

    # VMEM budget: double-buffered activation/weight/output blocks plus the
    # f32 intermediates (q/k/v, scores, probs, out).  v5e's scoped default is
    # only 16 MiB, so request the limit explicitly (capped under v7x's 64 MiB
    # physical VMEM).
    est = (n_act * rows * D * itemsize * 2
           + (2 * dk_pad + dv_pad) * D * itemsize * 2
           + rows * dv_pad * itemsize * 2
           + rows * (2 * dk_pad + dv_pad) * 4
           + 2 * rows * rows * 4
           + rows * dv_pad * 4)
    vmem_limit = int(min(64 << 20, max(32 << 20, 2 * est)))

    compiler_params = pltpu.CompilerParams(
        dimension_semantics=("parallel",),
        vmem_limit_bytes=vmem_limit,
    )

    if self_attn:
        # One activation slab (1/3 the HBM->VMEM DMA) + one fused QKV matmul.
        # Weights are grid-invariant (index_map always (0,0)), so they are
        # DMA'd only once across the whole grid.
        w_fused = jnp.concatenate([wq_p, wk_p, wv_p], axis=1)
        kernel = functools.partial(_attention_kernel_fused, block_b=block_b,
                                   seq=S, dk_pad=dk_pad, scale=scale,
                                   mxu_dtype=mxu_dtype)
        in_specs = [act_spec,
                    pl.BlockSpec((D, 2 * dk_pad + dv_pad), lambda b: (0, 0))]
        args = (xq2, w_fused)
    else:
        kernel = functools.partial(_attention_kernel, block_b=block_b, seq=S,
                                   scale=scale, mxu_dtype=mxu_dtype)
        wk_spec = pl.BlockSpec((D, dk_pad), lambda b: (0, 0))
        wv_spec = pl.BlockSpec((D, dv_pad), lambda b: (0, 0))
        in_specs = [act_spec, act_spec, act_spec, wk_spec, wk_spec, wv_spec]
        args = (xq2, xk.reshape(B * S, D), xv.reshape(B * S, D),
                wq_p, wk_p, wv_p)

    out = pl.pallas_call(
        kernel,
        out_shape=jax.ShapeDtypeStruct((B * S, dv_pad), xq.dtype),
        grid_spec=pltpu.PrefetchScalarGridSpec(
            num_scalar_prefetch=0,
            grid=(nb,),
            in_specs=in_specs,
            out_specs=out_spec,
        ),
        compiler_params=compiler_params,
        cost_estimate=cost,
    )(*args)

    # Drop the lane padding.  (At scale, consider letting downstream consume
    # the padded (B, S, dv_pad) layout directly to avoid the slice.)
    return out.reshape(B, S, dv_pad)[..., :d_v]


def _xavier_uniform(key, fan_in, fan_out, shape):
    bound = math.sqrt(6.0 / (fan_in + fan_out))
    return jax.random.uniform(key, shape, jnp.float32, -bound, bound)


def _reference(xq, xk, xv, wq, wk, wv, d_k):
    """float64 numpy ground truth (avoids TPU default-precision ambiguity)."""
    xq = np.asarray(xq, np.float64)
    xk = np.asarray(xk, np.float64)
    xv = np.asarray(xv, np.float64)
    wq = np.asarray(wq, np.float64)
    wk = np.asarray(wk, np.float64)
    wv = np.asarray(wv, np.float64)
    q = xq @ wq
    k = xk @ wk
    v = xv @ wv
    s = np.einsum("bqd,bkd->bqk", q, k) / np.sqrt(d_k)
    s = s - s.max(axis=-1, keepdims=True)
    p = np.exp(s)
    p = p / p.sum(axis=-1, keepdims=True)
    return np.einsum("bqk,bkd->bqd", p, v)


if __name__ == "__main__":
    # Small shapes implied by the module: inputs is a 3-tuple of (B, S, input_shape).
    B, S, input_shape = 2, 8, 32
    d_k, d_v = 16, 16

    key = jax.random.PRNGKey(0)
    k_xq, k_xk, k_xv, k_wq, k_wk, k_wv = jax.random.split(key, 6)

    xq = jax.random.normal(k_xq, (B, S, input_shape), jnp.float32)
    xk = jax.random.normal(k_xk, (B, S, input_shape), jnp.float32)
    xv = jax.random.normal(k_xv, (B, S, input_shape), jnp.float32)

    # torch.nn.Linear(input_shape, d_k).weight has shape (d_k, input_shape);
    # we store the transpose (input_shape, d_k) so the kernel does x @ W.
    wq = _xavier_uniform(k_wq, input_shape, d_k, (input_shape, d_k))
    wk = _xavier_uniform(k_wk, input_shape, d_k, (input_shape, d_k))
    wv = _xavier_uniform(k_wv, input_shape, d_v, (input_shape, d_v))

    ref = _reference(xq, xk, xv, wq, wk, wv, d_k)

    # 1) Default path: bf16 MXU operands, f32 accumulation + f32 softmax,
    #    block_b=1 -> 2 grid steps (pipelining / v7x megacore sharding).
    out = jax.block_until_ready(single_attention(xq, xk, xv, wq, wk, wv, d_k))
    np.testing.assert_allclose(np.asarray(out, np.float64), ref,
                               rtol=2e-2, atol=2e-2)

    # 2) Full-f32 MXU path: tight numerics (exact softmax divide).
    out_f32 = jax.block_until_ready(
        single_attention(xq, xk, xv, wq, wk, wv, d_k, mxu_dtype=None))
    np.testing.assert_allclose(np.asarray(out_f32, np.float64), ref,
                               rtol=5e-4, atol=5e-4)

    # 3) Packed path: both batch elements in one grid step via the
    #    block-diagonal-masked gram matmul (full MXU sublane height).
    out_packed = jax.block_until_ready(
        single_attention(xq, xk, xv, wq, wk, wv, d_k, block_b=B,
                         mxu_dtype=None))
    np.testing.assert_allclose(np.asarray(out_packed, np.float64), ref,
                               rtol=5e-4, atol=5e-4)

    # 4) Self-attention dedup path (same tensor for q/k/v inputs).
    ref_self = _reference(xq, xq, xq, wq, wk, wv, d_k)
    out_self = jax.block_until_ready(
        single_attention(xq, xq, xq, wq, wk, wv, d_k, mxu_dtype=None))
    np.testing.assert_allclose(np.asarray(out_self, np.float64), ref_self,
                               rtol=5e-4, atol=5e-4)

    print("KERNEL_OK")
</pallas_src>

<mosaic_0001>
module attributes {stable_mosaic.version = 11 : i64} {
  func.func @_attention_kernel(%arg0: i32, %arg1: memref<8x32xf32, #tpu.memory_space<vmem>>, %arg2: memref<8x32xf32, #tpu.memory_space<vmem>>, %arg3: memref<8x32xf32, #tpu.memory_space<vmem>>, %arg4: memref<32x128xf32, #tpu.memory_space<vmem>>, %arg5: memref<32x128xf32, #tpu.memory_space<vmem>>, %arg6: memref<32x128xf32, #tpu.memory_space<vmem>>, %arg7: memref<8x128xf32, #tpu.memory_space<vmem>>) attributes {dimension_semantics = [#tpu.dimension_semantics<parallel>], iteration_bounds = array<i64: 2>, scalar_prefetch = 0 : i64, scratch_operands = 0 : i64, tpu.core_type = #tpu.core_type<tc>, window_params = [{transform_indices = @transform_0, window_bounds = array<i64: 8, 32>}, {transform_indices = @transform_1, window_bounds = array<i64: 8, 32>}, {transform_indices = @transform_2, window_bounds = array<i64: 8, 32>}, {pipeline_mode = #tpu.pipeline_mode<synchronous>, transform_indices = @transform_3, window_bounds = array<i64: 32, 128>}, {pipeline_mode = #tpu.pipeline_mode<synchronous>, transform_indices = @transform_4, window_bounds = array<i64: 32, 128>}, {pipeline_mode = #tpu.pipeline_mode<synchronous>, transform_indices = @transform_5, window_bounds = array<i64: 32, 128>}, {transform_indices = @transform_6, window_bounds = array<i64: 8, 128>}]} {
    %c0 = arith.constant 0 : index
    %c0_0 = arith.constant 0 : index
    %0 = vector.load %arg4[%c0, %c0_0] : memref<32x128xf32, #tpu.memory_space<vmem>>, vector<32x128xf32>
    %1 = arith.truncf %0 : vector<32x128xf32> to vector<32x128xbf16>
    %c0_1 = arith.constant 0 : index
    %c0_2 = arith.constant 0 : index
    %2 = vector.load %arg5[%c0_1, %c0_2] : memref<32x128xf32, #tpu.memory_space<vmem>>, vector<32x128xf32>
    %3 = arith.truncf %2 : vector<32x128xf32> to vector<32x128xbf16>
    %c0_3 = arith.constant 0 : index
    %c0_4 = arith.constant 0 : index
    %4 = vector.load %arg6[%c0_3, %c0_4] : memref<32x128xf32, #tpu.memory_space<vmem>>, vector<32x128xf32>
    %5 = arith.truncf %4 : vector<32x128xf32> to vector<32x128xbf16>
    %c0_5 = arith.constant 0 : index
    %c0_6 = arith.constant 0 : index
    %6 = vector.load %arg1[%c0_5, %c0_6] : memref<8x32xf32, #tpu.memory_space<vmem>>, vector<8x32xf32>
    %7 = arith.truncf %6 : vector<8x32xf32> to vector<8x32xbf16>
    %c0_7 = arith.constant 0 : index
    %c0_8 = arith.constant 0 : index
    %8 = vector.load %arg2[%c0_7, %c0_8] : memref<8x32xf32, #tpu.memory_space<vmem>>, vector<8x32xf32>
    %9 = arith.truncf %8 : vector<8x32xf32> to vector<8x32xbf16>
    %c0_9 = arith.constant 0 : index
    %c0_10 = arith.constant 0 : index
    %10 = vector.load %arg3[%c0_9, %c0_10] : memref<8x32xf32, #tpu.memory_space<vmem>>, vector<8x32xf32>
    %11 = arith.truncf %10 : vector<8x32xf32> to vector<8x32xbf16>
    %cst = arith.constant dense<0.000000e+00> : vector<8x128xf32>
    %12 = tpu.matmul %7, %1, %cst {dimension_numbers = #tpu.dot_dimension_numbers<[1], [0], [0], [1], [0, 0, 1, 1], [], []>} : vector<8x32xbf16>, vector<32x128xbf16>, vector<8x128xf32> -> vector<8x128xf32>
    %cst_11 = arith.constant dense<0.000000e+00> : vector<8x128xf32>
    %13 = tpu.matmul %9, %3, %cst_11 {dimension_numbers = #tpu.dot_dimension_numbers<[1], [0], [0], [1], [0, 0, 1, 1], [], []>} : vector<8x32xbf16>, vector<32x128xbf16>, vector<8x128xf32> -> vector<8x128xf32>
    %cst_12 = arith.constant dense<0.000000e+00> : vector<8x128xf32>
    %14 = tpu.matmul %11, %5, %cst_12 {dimension_numbers = #tpu.dot_dimension_numbers<[1], [0], [0], [1], [0, 0, 1, 1], [], []>} : vector<8x32xbf16>, vector<32x128xbf16>, vector<8x128xf32> -> vector<8x128xf32>
    %cst_13 = arith.constant 2.500000e-01 : f32
    %15 = vector.broadcast %cst_13 : f32 to vector<8x128xf32>
    %16 = arith.mulf %12, %15 : vector<8x128xf32>
    %17 = arith.truncf %16 : vector<8x128xf32> to vector<8x128xbf16>
    %18 = arith.truncf %13 : vector<8x128xf32> to vector<8x128xbf16>
    %cst_14 = arith.constant dense<0.000000e+00> : vector<8x8xf32>
    %19 = tpu.matmul %17, %18, %cst_14 {dimension_numbers = #tpu.dot_dimension_numbers<[1], [1], [0], [0], [0, 0, 1, 0], [], []>} : vector<8x128xbf16>, vector<8x128xbf16>, vector<8x8xf32> -> vector<8x8xf32>
    %cst_15 = arith.constant dense<0xFF800000> : vector<8xf32>
    %20 = vector.multi_reduction <maximumf>, %19, %cst_15 [1] : vector<8x8xf32> to vector<8xf32>
    %21 = vector.shape_cast %20 : vector<8xf32> to vector<8x1xf32>
    %22 = vector.broadcast %21 : vector<8x1xf32> to vector<8x8xf32>
    %23 = arith.subf %19, %22 : vector<8x8xf32>
    %24 = math.exp %23 : vector<8x8xf32>
    %cst_16 = arith.constant dense<0.000000e+00> : vector<8xf32>
    %25 = vector.multi_reduction <add>, %24, %cst_16 [1] : vector<8x8xf32> to vector<8xf32>
    %26 = vector.shape_cast %25 : vector<8xf32> to vector<8x1xf32>
    %27 = arith.truncf %24 : vector<8x8xf32> to vector<8x8xbf16>
    %28 = arith.truncf %14 : vector<8x128xf32> to vector<8x128xbf16>
    %cst_17 = arith.constant dense<0.000000e+00> : vector<8x128xf32>
    %29 = tpu.matmul %27, %28, %cst_17 {dimension_numbers = #tpu.dot_dimension_numbers<[1], [0], [0], [1], [0, 0, 1, 1], [], []>} : vector<8x8xbf16>, vector<8x128xbf16>, vector<8x128xf32> -> vector<8x128xf32>
    %30 = vector.broadcast %26 : vector<8x1xf32> to vector<8x128xf32>
    %31 = arith.divf %29, %30 : vector<8x128xf32>
    %c0_18 = arith.constant 0 : index
    %c0_19 = arith.constant 0 : index
    %32 = vector.load %arg7[%c0_18, %c0_19] : memref<8x128xf32, #tpu.memory_space<vmem>>, vector<8x128xf32>
    tpu.vector_store %arg7[%c0_18, %c0_19], %31 {strides = array<i32>} : memref<8x128xf32, #tpu.memory_space<vmem>>, vector<8x128xf32>,
    return
  }
  func.func @transform_0(%arg0: i32) -> (i32, i32) {
    %c0_i32 = arith.constant 0 : i32
    %c0_i32_0 = arith.constant 0 : i32
    return %arg0, %c0_i32 : i32, i32
  }
  func.func @transform_1(%arg0: i32) -> (i32, i32) {
    %c0_i32 = arith.constant 0 : i32
    %c0_i32_0 = arith.constant 0 : i32
    return %arg0, %c0_i32 : i32, i32
  }
  func.func @transform_2(%arg0: i32) -> (i32, i32) {
    %c0_i32 = arith.constant 0 : i32
    %c0_i32_0 = arith.constant 0 : i32
    return %arg0, %c0_i32 : i32, i32
  }
  func.func @transform_3(%arg0: i32) -> (i32, i32) {
    %c0_i32 = arith.constant 0 : i32
    %c0_i32_0 = arith.constant 0 : i32
    %c0_i32_1 = arith.constant 0 : i32
    return %c0_i32, %c0_i32_0 : i32, i32
  }
  func.func @transform_4(%arg0: i32) -> (i32, i32) {
    %c0_i32 = arith.constant 0 : i32
    %c0_i32_0 = arith.constant 0 : i32
    %c0_i32_1 = arith.constant 0 : i32
    return %c0_i32, %c0_i32_0 : i32, i32
  }
  func.func @transform_5(%arg0: i32) -> (i32, i32) {
    %c0_i32 = arith.constant 0 : i32
    %c0_i32_0 = arith.constant 0 : i32
    %c0_i32_1 = arith.constant 0 : i32
    return %c0_i32, %c0_i32_0 : i32, i32
  }
  func.func @transform_6(%arg0: i32) -> (i32, i32) {
    %c0_i32 = arith.constant 0 : i32
    %c0_i32_0 = arith.constant 0 : i32
    return %arg0, %c0_i32 : i32, i32
  }
}

</mosaic_0001>

<llo_original>
// kernel: tpu_custom_call.1
$region0: #{tpu_custom_call.1}
  #allocation0 [shape = 'u32[]', space=smem, size = 0x4, offset = 0x4, fixed_abs, tag = 'smem constant byte address 0x4 - core index']
  #allocation1 [shape = 'u32[144,128]{1,0:T(1,128)}', space=vmem, size = 0x12000, scoped, tag = 'internal scratch']
  %s0 = inlined_call_operand.hbm [shape: f32[16,32], index: 0, kind: input, shape index: {}]
  %s1 = inlined_call_operand.hbm [shape: f32[16,32], index: 1, kind: input, shape index: {}]
  %s2 = inlined_call_operand.hbm [shape: f32[16,32], index: 2, kind: input, shape index: {}]
  %s3 = inlined_call_operand.hbm [shape: f32[32,128], index: 3, kind: input, shape index: {}]
  %s4 = inlined_call_operand.hbm [shape: f32[32,128], index: 4, kind: input, shape index: {}]
  %s5 = inlined_call_operand.hbm [shape: f32[32,128], index: 5, kind: input, shape index: {}]
  %s6 = inlined_call_operand.hbm [shape: f32[16,128], index: 6, kind: output, shape index: {}]
  %s7 = sld [smem:[#allocation0]]
  $region81: #{tpu_custom_call.1} parent=0
    _
  %s9 = ssub.s32 1, %s7
  %s10 = scalar_select 0, %s9, %s7
  $region1: #{tpu_custom_call.1} parent=0
    #allocation2 [shape = 'u8[8192]{0}', space=vmem, size = 0x2000, scoped, tag = 'input window, operand 0']
    #allocation3 [shape = 's32[2]{0}', space=sflag, size = 0x8, scoped, tag = 'scoped memory for tpu_custom_call.1']
    #allocation4 [shape = 's32[2]{0}', space=sflag, size = 0x8, scoped, tag = 'scoped memory for tpu_custom_call.1']
    #allocation5 [shape = 'u8[8192]{0}', space=vmem, size = 0x2000, scoped, tag = 'input window, operand 1']
    #allocation6 [shape = 's32[2]{0}', space=sflag, size = 0x8, scoped, tag = 'scoped memory for tpu_custom_call.1']
    #allocation7 [shape = 'u8[8192]{0}', space=vmem, size = 0x2000, scoped, tag = 'input window, operand 2']
    #allocation8 [shape = 'u8[16384]{0}', space=vmem, size = 0x4000, scoped, tag = 'input window, operand 3, single buffered']
    #allocation9 [shape = 's32[1]{0}', space=sflag, size = 0x4, scoped, tag = 'scoped memory for tpu_custom_call.1']
    #allocation10 [shape = 'u8[16384]{0}', space=vmem, size = 0x4000, scoped, tag = 'input window, operand 4, single buffered']
    #allocation11 [shape = 'u8[16384]{0}', space=vmem, size = 0x4000, scoped, tag = 'input window, operand 5, single buffered']
    #allocation12 [shape = 's32[1]{0}', space=sflag, size = 0x4, scoped, tag = 'scoped memory for tpu_custom_call.1']
    #allocation13 [shape = 'u8[8192]{0}', space=vmem, size = 0x2000, scoped, tag = 'output window, operand 0']
    %11 = vsyncpa [#allocation3], 0
    %s12 = scalar_lea.sflag [#allocation3], 1
    %13 = vsyncpa %s12, 0
    %14 = vsyncpa [#allocation6], 0
    %s15 = scalar_lea.sflag [#allocation6], 1
    %16 = vsyncpa %s15, 0
    %17 = vsyncpa [#allocation9], 0
    %18 = vsyncpa [#allocation12], 0
    %19 = vsyncpa [#allocation4], 0
    %s20 = scalar_lea.sflag [#allocation4], 1
    %21 = vsyncpa %s20, 0
    loop: start=0, step=1, limit=4
    $region2: #{tpu_custom_call.1} parent=1 // loop_pre_header
      _
    $region3: #{tpu_custom_call.1} parent=1 // loop_header
      %s23 = sphi 0, %s27
      %p24 = scmp.ge.s32.totalorder %s23, 4
      %s33 = sphi 0, %s35
      %s36 = sphi 0, %s33
      %s37 = sphi 0, %s36
      %s53 = sphi 0, %s37
      %s59 = sphi 0, %s61
      %s62 = sphi 0, %s59
      %s63 = sphi 0, %s62
      %s79 = sphi 0, %s63
      %s85 = sphi 0, %s87
      %s88 = sphi 0, %s85
      %s89 = sphi 0, %s88
      %s105 = sphi 0, %s89
      %s109 = sphi 0, %s109
      %s111 = sphi 0, %s109
      %s112 = sphi 0, %s111
      %s126 = sphi 0, %s112
      %s130 = sphi 0, %s130
      %s132 = sphi 0, %s130
      %s133 = sphi 0, %s132
      %s147 = sphi 0, %s133
      %s151 = sphi 0, %s151
      %s153 = sphi 0, %s151
      %s154 = sphi 0, %s153
      %s168 = sphi 0, %s154
      %s174 = sphi 0, %s176
      %s177 = sphi 0, %s174
      %s178 = sphi 0, %s177
      %s194 = sphi 0, %s178
    $region4: #{tpu_custom_call.1} parent=1 // loop_header_branch
      %26 = sbr.rel (%p24) target = $region8
    $region5: #{tpu_custom_call.1} parent=1 // loop_body
      %s28 = ssub.s32 %s23, 1
      %s29 = ssub.s32 %s23, 2
      %s30 = sadd.s32 %s23, 1
      %s31 = ssub.s32 %s23, %s30
      %p32 = scmp.eq.s32.totalorder %s31, 0
      %s34 = sadd.s32 %s33, 1
      %s35 = scalar_select %p32, %s33, %s34
      %p38 = pneg %p32
      %p39 = scmp.eq.s32.totalorder %s23, 1
      %p40 = por %p38, %p39
      %p41 = scmp.ne.s32.totalorder %s33, %s36
      %p42 = scmp.eq.s32.totalorder %s23, 0
      %p43 = por %p41, %p42
      %p44 = scmp.ne.s32.totalorder %s33, %s36
      %p45 = scmp.eq.s32.totalorder %s28, 1
      %p46 = por %p44, %p45
      %p47 = scmp.ne.s32.totalorder %s36, %s37
      %p48 = scmp.eq.s32.totalorder %s28, 0
      %p49 = por %p47, %p48
      %p50 = scmp.ne.s32.totalorder %s36, %s37
      %p51 = scmp.eq.s32.totalorder %s29, 1
      %p52 = por %p50, %p51
      %p54 = scmp.ne.s32.totalorder %s37, %s53
      %p55 = scmp.eq.s32.totalorder %s29, 0
      %p56 = por %p54, %p55
      %s57 = ssub.s32 %s23, %s30
      %p58 = scmp.eq.s32.totalorder %s57, 0
      %s60 = sadd.s32 %s59, 1
      %s61 = scalar_select %p58, %s59, %s60
      %p64 = pneg %p58
      %p65 = scmp.eq.s32.totalorder %s23, 1
      %p66 = por %p64, %p65
      %p67 = scmp.ne.s32.totalorder %s59, %s62
      %p68 = scmp.eq.s32.totalorder %s23, 0
      %p69 = por %p67, %p68
      %p70 = scmp.ne.s32.totalorder %s59, %s62
      %p71 = scmp.eq.s32.totalorder %s28, 1
      %p72 = por %p70, %p71
      %p73 = scmp.ne.s32.totalorder %s62, %s63
      %p74 = scmp.eq.s32.totalorder %s28, 0
      %p75 = por %p73, %p74
      %p76 = scmp.ne.s32.totalorder %s62, %s63
      %p77 = scmp.eq.s32.totalorder %s29, 1
      %p78 = por %p76, %p77
      %p80 = scmp.ne.s32.totalorder %s63, %s79
      %p81 = scmp.eq.s32.totalorder %s29, 0
      %p82 = por %p80, %p81
      %s83 = ssub.s32 %s23, %s30
      %p84 = scmp.eq.s32.totalorder %s83, 0
      %s86 = sadd.s32 %s85, 1
      %s87 = scalar_select %p84, %s85, %s86
      %p90 = pneg %p84
      %p91 = scmp.eq.s32.totalorder %s23, 1
      %p92 = por %p90, %p91
      %p93 = scmp.ne.s32.totalorder %s85, %s88
      %p94 = scmp.eq.s32.totalorder %s23, 0
      %p95 = por %p93, %p94
      %p96 = scmp.ne.s32.totalorder %s85, %s88
      %p97 = scmp.eq.s32.totalorder %s28, 1
      %p98 = por %p96, %p97
      %p99 = scmp.ne.s32.totalorder %s88, %s89
      %p100 = scmp.eq.s32.totalorder %s28, 0
      %p101 = por %p99, %p100
      %p102 = scmp.ne.s32.totalorder %s88, %s89
      %p103 = scmp.eq.s32.totalorder %s29, 1
      %p104 = por %p102, %p103
      %p106 = scmp.ne.s32.totalorder %s89, %s105
      %p107 = scmp.eq.s32.totalorder %s29, 0
      %p108 = por %p106, %p107
      %s110 = sadd.s32 %s109, 1
      %p113 = scmp.eq.s32.totalorder %s23, 1
      %p114 = scmp.ne.s32.totalorder %s109, %s111
      %p115 = scmp.eq.s32.totalorder %s23, 0
      %p116 = por %p114, %p115
      %p117 = scmp.ne.s32.totalorder %s109, %s111
      %p118 = scmp.eq.s32.totalorder %s28, 1
      %p119 = por %p117, %p118
      %p120 = scmp.ne.s32.totalorder %s111, %s112
      %p121 = scmp.eq.s32.totalorder %s28, 0
      %p122 = por %p120, %p121
      %p123 = scmp.ne.s32.totalorder %s111, %s112
      %p124 = scmp.eq.s32.totalorder %s29, 1
      %p125 = por %p123, %p124
      %p127 = scmp.ne.s32.totalorder %s112, %s126
      %p128 = scmp.eq.s32.totalorder %s29, 0
      %p129 = por %p127, %p128
      %s131 = sadd.s32 %s130, 1
      %p134 = scmp.eq.s32.totalorder %s23, 1
      %p135 = scmp.ne.s32.totalorder %s130, %s132
      %p136 = scmp.eq.s32.totalorder %s23, 0
      %p137 = por %p135, %p136
      %p138 = scmp.ne.s32.totalorder %s130, %s132
      %p139 = scmp.eq.s32.totalorder %s28, 1
      %p140 = por %p138, %p139
      %p141 = scmp.ne.s32.totalorder %s132, %s133
      %p142 = scmp.eq.s32.totalorder %s28, 0
      %p143 = por %p141, %p142
      %p144 = scmp.ne.s32.totalorder %s132, %s133
      %p145 = scmp.eq.s32.totalorder %s29, 1
      %p146 = por %p144, %p145
      %p148 = scmp.ne.s32.totalorder %s133, %s147
      %p149 = scmp.eq.s32.totalorder %s29, 0
      %p150 = por %p148, %p149
      %s152 = sadd.s32 %s151, 1
      %p155 = scmp.eq.s32.totalorder %s23, 1
      %p156 = scmp.ne.s32.totalorder %s151, %s153
      %p157 = scmp.eq.s32.totalorder %s23, 0
      %p158 = por %p156, %p157
      %p159 = scmp.ne.s32.totalorder %s151, %s153
      %p160 = scmp.eq.s32.totalorder %s28, 1
      %p161 = por %p159, %p160
      %p162 = scmp.ne.s32.totalorder %s153, %s154
      %p163 = scmp.eq.s32.totalorder %s28, 0
      %p164 = por %p162, %p163
      %p165 = scmp.ne.s32.totalorder %s153, %s154
      %p166 = scmp.eq.s32.totalorder %s29, 1
      %p167 = por %p165, %p166
      %p169 = scmp.ne.s32.totalorder %s154, %s168
      %p170 = scmp.eq.s32.totalorder %s29, 0
      %p171 = por %p169, %p170
      %s172 = ssub.s32 %s23, %s30
      %p173 = scmp.eq.s32.totalorder %s172, 0
      %s175 = sadd.s32 %s174, 1
      %s176 = scalar_select %p173, %s174, %s175
      %p179 = pneg %p173
      %p180 = scmp.eq.s32.totalorder %s23, 1
      %p181 = por %p179, %p180
      %p182 = scmp.ne.s32.totalorder %s174, %s177
      %p183 = scmp.eq.s32.totalorder %s23, 0
      %p184 = por %p182, %p183
      %p185 = scmp.ne.s32.totalorder %s174, %s177
      %p186 = scmp.eq.s32.totalorder %s28, 1
      %p187 = por %p185, %p186
      %p188 = scmp.ne.s32.totalorder %s177, %s178
      %p189 = scmp.eq.s32.totalorder %s28, 0
      %p190 = por %p188, %p189
      %p191 = scmp.ne.s32.totalorder %s177, %s178
      %p192 = scmp.eq.s32.totalorder %s29, 1
      %p193 = por %p191, %p192
      %p195 = scmp.ne.s32.totalorder %s178, %s194
      %p196 = scmp.eq.s32.totalorder %s29, 0
      %p197 = por %p195, %p196
      %p198 = scmp.le.s32.totalorder 1, %s23
      %p199 = scmp.lt.s32.totalorder %s23, 3
      %p200 = pnand %p198, %p199
      %p201 = pneg %p200
      // Predicated region
      $region9: #{tpu_custom_call.1} parent=5 // pred_check
        _
      $region10: #{tpu_custom_call.1} parent=5 // pred_check_branch
        %203 = sbr.rel (%p200) target = $region12
      $region11: #{tpu_custom_call.1} parent=5 // pred_region
        %s204 = ssub.s32 %s23, 1
        // Predicated region
        $region13: #{tpu_custom_call.1} parent=11 // pred_check
          %p205 = pneg %p122
        $region14: #{tpu_custom_call.1} parent=11 // pred_check_branch
          %207 = sbr.rel (%p205) target = $region16
        $region15: #{tpu_custom_call.1} parent=11 // pred_region
          %s209 = ssub.s32 512, 512
          %210 = vsyncadd [#allocation9], %s209
          %s211 = sshll.u32 [#allocation8], 4
          %s212 = int_to_ptr.vmem [resolvable:$true] %s211
          %217 = dma.hbm_to_vmem [thread:$0]  %s3, 512, %s212, [#allocation9], 128, 128, 8
        $region16: #{tpu_custom_call.1} parent=11 // pred_fallthru
          _
        // Predicated region
        $region17: #{tpu_custom_call.1} parent=11 // pred_check
          %p218 = pneg %p143
        $region18: #{tpu_custom_call.1} parent=11 // pred_check_branch
          %220 = sbr.rel (%p218) target = $region20
        $region19: #{tpu_custom_call.1} parent=11 // pred_region
          %s222 = ssub.s32 512, 512
          %223 = vsyncadd [#allocation9], %s222
          %s224 = sshll.u32 [#allocation10], 4
          %s225 = int_to_ptr.vmem [resolvable:$true] %s224
          %230 = dma.hbm_to_vmem [thread:$0]  %s4, 512, %s225, [#allocation9], 128, 128, 8
        $region20: #{tpu_custom_call.1} parent=11 // pred_fallthru
          _
        // Predicated region
        $region21: #{tpu_custom_call.1} parent=11 // pred_check
          %p231 = pneg %p164
        $region22: #{tpu_custom_call.1} parent=11 // pred_check_branch
          %233 = sbr.rel (%p231) target = $region24
        $region23: #{tpu_custom_call.1} parent=11 // pred_region
          %s235 = ssub.s32 512, 512
          %236 = vsyncadd [#allocation12], %s235
          %s237 = sshll.u32 [#allocation11], 4
          %s238 = int_to_ptr.vmem [resolvable:$true] %s237
          %243 = dma.hbm_to_vmem [thread:$0]  %s5, 512, %s238, [#allocation12], 128, 128, 8
        $region24: #{tpu_custom_call.1} parent=11 // pred_fallthru
          _
      $region12: #{tpu_custom_call.1} parent=5 // pred_fallthru
        _
      %p244 = scmp.lt.s32.totalorder %s23, 2
      // Predicated region
      $region25: #{tpu_custom_call.1} parent=5 // pred_check
        %p245 = pneg %p244
      $region26: #{tpu_custom_call.1} parent=5 // pred_check_branch
        %247 = sbr.rel (%p245) target = $region28
      $region27: #{tpu_custom_call.1} parent=5 // pred_region
        // Predicated region
        $region29: #{tpu_custom_call.1} parent=27 // pred_check
          %p248 = pneg %p43
        $region30: #{tpu_custom_call.1} parent=27 // pred_check_branch
          %250 = sbr.rel (%p248) target = $region32
        $region31: #{tpu_custom_call.1} parent=27 // pred_region
          %s251 = sand.u32 %s33, 1
          %s252 = scalar_lea.sflag [#allocation3], %s251
          %s253 = sand.u32 %s33, 1
          %s254 = smul.addr %s253, 8
          %s255 = scalar_lea.vmem [#allocation2], %s254
          %s257 = ssub.s32 128, 128
          %258 = vsyncadd %s252, %s257
          %s259 = smul.addr %s23, 128
          %s260 = scalar_lea.hbm %s0, %s259
          %s262 = sshll.u32 %s255, 4
          %s263 = int_to_ptr.vmem [resolvable:$true] %s262
          %265 = dma.hbm_to_vmem [thread:$0]  %s260, 128, %s263, %s252
        $region32: #{tpu_custom_call.1} parent=27 // pred_fallthru
          _
        // Predicated region
        $region33: #{tpu_custom_call.1} parent=27 // pred_check
          %p266 = pneg %p69
        $region34: #{tpu_custom_call.1} parent=27 // pred_check_branch
          %268 = sbr.rel (%p266) target = $region36
        $region35: #{tpu_custom_call.1} parent=27 // pred_region
          %s269 = sand.u32 %s23, 1
          %s270 = scalar_lea.sflag [#allocation6], %s269
          %s271 = sand.u32 %s59, 1
          %s272 = smul.addr %s271, 8
          %s273 = scalar_lea.vmem [#allocation5], %s272
          %s275 = ssub.s32 128, 128
          %276 = vsyncadd %s270, %s275
          %s277 = smul.addr %s23, 128
          %s278 = scalar_lea.hbm %s1, %s277
          %s280 = sshll.u32 %s273, 4
          %s281 = int_to_ptr.vmem [resolvable:$true] %s280
          %283 = dma.hbm_to_vmem [thread:$0]  %s278, 128, %s281, %s270
        $region36: #{tpu_custom_call.1} parent=27 // pred_fallthru
          _
        // Predicated region
        $region37: #{tpu_custom_call.1} parent=27 // pred_check
          %p284 = pneg %p95
        $region38: #{tpu_custom_call.1} parent=27 // pred_check_branch
          %286 = sbr.rel (%p284) target = $region40
        $region39: #{tpu_custom_call.1} parent=27 // pred_region
          %s287 = sand.u32 %s23, 1
          %s288 = scalar_lea.sflag [#allocation6], %s287
          %s289 = sand.u32 %s85, 1
          %s290 = smul.addr %s289, 8
          %s291 = scalar_lea.vmem [#allocation7], %s290
          %s293 = ssub.s32 128, 128
          %294 = vsyncadd %s288, %s293
          %s295 = smul.addr %s23, 128
          %s296 = scalar_lea.hbm %s2, %s295
          %s298 = sshll.u32 %s291, 4
          %s299 = int_to_ptr.vmem [resolvable:$true] %s298
          %301 = dma.hbm_to_vmem [thread:$0]  %s296, 128, %s299, %s288
        $region40: #{tpu_custom_call.1} parent=27 // pred_fallthru
          _
      $region28: #{tpu_custom_call.1} parent=5 // pred_fallthru
        _
      %p302 = scmp.le.s32.totalorder 1, %s23
      %p303 = scmp.lt.s32.totalorder %s23, 3
      %p304 = pnand %p302, %p303
      %p305 = pneg %p304
      // Predicated region
      $region41: #{tpu_custom_call.1} parent=5 // pred_check
        _
      $region42: #{tpu_custom_call.1} parent=5 // pred_check_branch
        %307 = sbr.rel (%p304) target = $region44
      $region43: #{tpu_custom_call.1} parent=5 // pred_region
        %s308 = ssub.s32 %s23, 1
        %s309 = sand.u32 %s36, 1
        %s310 = scalar_lea.sflag [#allocation3], %s309
        %s311 = sand.u32 %s36, 1
        %s312 = smul.addr %s311, 8
        %s313 = scalar_lea.vmem [#allocation2], %s312
        // Predicated region
        $region45: #{tpu_custom_call.1} parent=43 // pred_check
          %p314 = pneg %p49
        $region46: #{tpu_custom_call.1} parent=43 // pred_check_branch
          %316 = sbr.rel (%p314) target = $region48
        $region47: #{tpu_custom_call.1} parent=43 // pred_region
          %317 = dma.done %s310, 128
        $region48: #{tpu_custom_call.1} parent=43 // pred_fallthru
          _
        %s318 = sand.u32 %s28, 1
        %s319 = scalar_lea.sflag [#allocation6], %s318
        %s320 = sand.u32 %s62, 1
        %s321 = smul.addr %s320, 8
        %s322 = scalar_lea.vmem [#allocation5], %s321
        // Predicated region
        $region49: #{tpu_custom_call.1} parent=43 // pred_check
          %p323 = pneg %p75
        $region50: #{tpu_custom_call.1} parent=43 // pred_check_branch
          %325 = sbr.rel (%p323) target = $region52
        $region51: #{tpu_custom_call.1} parent=43 // pred_region
          %326 = dma.done %s319, 128
        $region52: #{tpu_custom_call.1} parent=43 // pred_fallthru
          _
        %s327 = sand.u32 %s28, 1
        %s328 = scalar_lea.sflag [#allocation6], %s327
        %s329 = sand.u32 %s88, 1
        %s330 = smul.addr %s329, 8
        %s331 = scalar_lea.vmem [#allocation7], %s330
        // Predicated region
        $region53: #{tpu_custom_call.1} parent=43 // pred_check
          %p332 = pneg %p101
        $region54: #{tpu_custom_call.1} parent=43 // pred_check_branch
          %334 = sbr.rel (%p332) target = $region56
        $region55: #{tpu_custom_call.1} parent=43 // pred_region
          %335 = dma.done %s328, 128
        $region56: #{tpu_custom_call.1} parent=43 // pred_fallthru
          _
        // Predicated region
        $region57: #{tpu_custom_call.1} parent=43 // pred_check
          %p336 = pneg %p122
        $region58: #{tpu_custom_call.1} parent=43 // pred_check_branch
          %338 = sbr.rel (%p336) target = $region60
        $region59: #{tpu_custom_call.1} parent=43 // pred_region
          %339 = dma.done [#allocation9], 512
        $region60: #{tpu_custom_call.1} parent=43 // pred_fallthru
          _
        // Predicated region
        $region61: #{tpu_custom_call.1} parent=43 // pred_check
          %p340 = pneg %p143
        $region62: #{tpu_custom_call.1} parent=43 // pred_check_branch
          %342 = sbr.rel (%p340) target = $region64
        $region63: #{tpu_custom_call.1} parent=43 // pred_region
          %343 = dma.done [#allocation9], 512
        $region64: #{tpu_custom_call.1} parent=43 // pred_fallthru
          _
        // Predicated region
        $region65: #{tpu_custom_call.1} parent=43 // pred_check
          %p344 = pneg %p164
        $region66: #{tpu_custom_call.1} parent=43 // pred_check_branch
          %346 = sbr.rel (%p344) target = $region68
        $region67: #{tpu_custom_call.1} parent=43 // pred_region
          %347 = dma.done [#allocation12], 512
        $region68: #{tpu_custom_call.1} parent=43 // pred_fallthru
          _
        %s348 = sand.u32 %s36, 1
        %s349 = scalar_lea.sflag [#allocation3], %s348
        %s350 = sand.u32 %s36, 1
        %s351 = smul.addr %s350, 8
        %s352 = scalar_lea.vmem [#allocation2], %s351
        %p353 = pneg %p49
        %p354 = pneg %p46
        %s355 = sand.u32 %s28, 1
        %s356 = scalar_lea.sflag [#allocation6], %s355
        %s357 = sand.u32 %s62, 1
        %s358 = smul.addr %s357, 8
        %s359 = scalar_lea.vmem [#allocation5], %s358
        %p360 = pneg %p75
        %p361 = pneg %p72
        %s362 = sand.u32 %s28, 1
        %s363 = scalar_lea.sflag [#allocation6], %s362
        %s364 = sand.u32 %s88, 1
        %s365 = smul.addr %s364, 8
        %s366 = scalar_lea.vmem [#allocation7], %s365
        %p367 = pneg %p101
        %p368 = pneg %p98
        %p369 = pneg %p122
        %p370 = pneg %p119
        %p371 = pneg %p143
        %p372 = pneg %p140
        %p373 = pneg %p164
        %p374 = pneg %p161
        %p375 = pneg %p190
        %p376 = pneg %p187
        %s377 = sand.u32 %s177, 1
        %s378 = scalar_lea.sflag [#allocation4], %s377
        %s379 = sand.u32 %s177, 1
        %s380 = smul.addr %s379, 8
        %s381 = scalar_lea.vmem [#allocation13], %s380
        %v383 = vld [vmem:[#allocation8] sm:$0xff]
        %v384 = vld [vmem:[#allocation8 + $0x8] sm:$0xff]
        %v385 = vld [vmem:[#allocation8 + $0x10] sm:$0xff]
        %v386 = vld [vmem:[#allocation8 + $0x18] sm:$0xff]
        %v387 = vpack.c.bf16 %v384, %v383
        %v388 = vpack.c.bf16 %v386, %v385
        %v389 = vld [vmem:[#allocation10] sm:$0xff]
        %v390 = vld [vmem:[#allocation10 + $0x8] sm:$0xff]
        %v391 = vld [vmem:[#allocation10 + $0x10] sm:$0xff]
        %v392 = vld [vmem:[#allocation10 + $0x18] sm:$0xff]
        %v393 = vpack.c.bf16 %v390, %v389
        %v394 = vpack.c.bf16 %v392, %v391
        %v395 = vld [vmem:[#allocation11] sm:$0xff]
        %v396 = vld [vmem:[#allocation11 + $0x8] sm:$0xff]
        %v397 = vld [vmem:[#allocation11 + $0x10] sm:$0xff]
        %v398 = vld [vmem:[#allocation11 + $0x18] sm:$0xff]
        %v399 = vpack.c.bf16 %v396, %v395
        %v400 = vpack.c.bf16 %v398, %v397
        %v401 = vld [vmem:[%s313] sm:$0xff]
        %v402 = vpack.c.bf16 %v401, %v401
        %v403 = vld [vmem:[%s322] sm:$0xff]
        %v404 = vpack.c.bf16 %v403, %v403
        %v405 = vld [vmem:[%s331] sm:$0xff]
        %v406 = vpack.c.bf16 %v405, %v405
        %vm407 = vcmask 261120
        %v409 = vsel %vm407, %v402, 0
        %411 = vmatprep.subr.bf16.mxu0 0
        %412 = vmatpush1.bf16.msra.mxu0 0
        %413 = vmatprep.subr.bf16.mxu0 0
        %414 = vmatpush1.bf16.msra.mxu0 0
        %415 = vmatprep.subr.bf16.mxu0 0
        %416 = vmatpush1.bf16.msra.mxu0 0
        %417 = vmatprep.subr.bf16.mxu0 0
        %418 = vmatpush1.bf16.msra.mxu0 0
        %419 = vmatprep.subr.bf16.mxu0 0
        %420 = vmatpush1.bf16.msra.mxu0 0
        %421 = vmatprep.subr.bf16.mxu0 0
        %422 = vmatpush1.bf16.msra.mxu0 0
        %423 = vmatprep.subr.bf16.mxu0 0
        %424 = vmatpush1.bf16.msra.mxu0 %v388
        %425 = vmatprep.subr.bf16.mxu0 0
        %426 = vmatpush1.bf16.msra.mxu0 %v387
        %427 = vmatprep.subr.bf16.mxu0 0
        %428 = vmatpush2.bf16.msra.mxu0 0
        %429 = vmatprep.subr.bf16.mxu0 0
        %430 = vmatpush2.bf16.msra.mxu0 0
        %431 = vmatprep.subr.bf16.mxu0 0
        %432 = vmatpush2.bf16.msra.mxu0 0
        %433 = vmatprep.subr.bf16.mxu0 0
        %434 = vmatpush2.bf16.msra.mxu0 0
        %435 = vmatprep.subr.bf16.mxu0 0
        %436 = vmatpush2.bf16.msra.mxu0 0
        %437 = vmatprep.subr.bf16.mxu0 0
        %438 = vmatpush2.bf16.msra.mxu0 0
        %439 = vmatprep.subr.bf16.mxu0 0
        %440 = vmatpush2.bf16.msra.mxu0 0
        %441 = vmatprep.subr.bf16.mxu0 0
        %442 = vmatpush2.bf16.msra.mxu0 0
        %443 = vmatprep.mubr.bf16.mxu0 0
        %444 = vmatmul.mubr.bf16.gmra.mxu0 %v409
        %v445 = vpop.f32.mrf.mxu0
        %v446 = vadd.f32 0.0, %v445
        %v447 = vpop.f32.mrf.mxu0
        %v448 = vpop.f32.mrf.mxu0
        %v449 = vpop.f32.mrf.mxu0
        %450 = vdwg.mxu0
        %v452 = vsel %vm407, %v404, 0
        %454 = vmatprep.subr.bf16.mxu0 0
        %455 = vmatpush1.bf16.msra.mxu0 0
        %456 = vmatprep.subr.bf16.mxu0 0
        %457 = vmatpush1.bf16.msra.mxu0 0
        %458 = vmatprep.subr.bf16.mxu0 0
        %459 = vmatpush1.bf16.msra.mxu0 0
        %460 = vmatprep.subr.bf16.mxu0 0
        %461 = vmatpush1.bf16.msra.mxu0 0
        %462 = vmatprep.subr.bf16.mxu0 0
        %463 = vmatpush1.bf16.msra.mxu0 0
        %464 = vmatprep.subr.bf16.mxu0 0
        %465 = vmatpush1.bf16.msra.mxu0 0
        %466 = vmatprep.subr.bf16.mxu0 0
        %467 = vmatpush1.bf16.msra.mxu0 %v394
        %468 = vmatprep.subr.bf16.mxu0 0
        %469 = vmatpush1.bf16.msra.mxu0 %v393
        %470 = vmatprep.subr.bf16.mxu0 0
        %471 = vmatpush2.bf16.msra.mxu0 0
        %472 = vmatprep.subr.bf16.mxu0 0
        %473 = vmatpush2.bf16.msra.mxu0 0
        %474 = vmatprep.subr.bf16.mxu0 0
        %475 = vmatpush2.bf16.msra.mxu0 0
        %476 = vmatprep.subr.bf16.mxu0 0
        %477 = vmatpush2.bf16.msra.mxu0 0
        %478 = vmatprep.subr.bf16.mxu0 0
        %479 = vmatpush2.bf16.msra.mxu0 0
        %480 = vmatprep.subr.bf16.mxu0 0
        %481 = vmatpush2.bf16.msra.mxu0 0
        %482 = vmatprep.subr.bf16.mxu0 0
        %483 = vmatpush2.bf16.msra.mxu0 0
        %484 = vmatprep.subr.bf16.mxu0 0
        %485 = vmatpush2.bf16.msra.mxu0 0
        %486 = vmatprep.mubr.bf16.mxu0 0
        %487 = vmatmul.mubr.bf16.gmra.mxu0 %v452
        %v488 = vpop.f32.mrf.mxu0
        %v489 = vadd.f32 0.0, %v488
        %v490 = vpop.f32.mrf.mxu0
        %v491 = vpop.f32.mrf.mxu0
        %v492 = vpop.f32.mrf.mxu0
        %493 = vdwg.mxu0
        %v495 = vsel %vm407, %v406, 0
        %497 = vmatprep.subr.bf16.mxu0 0
        %498 = vmatpush1.bf16.msra.mxu0 0
        %499 = vmatprep.subr.bf16.mxu0 0
        %500 = vmatpush1.bf16.msra.mxu0 0
        %501 = vmatprep.subr.bf16.mxu0 0
        %502 = vmatpush1.bf16.msra.mxu0 0
        %503 = vmatprep.subr.bf16.mxu0 0
        %504 = vmatpush1.bf16.msra.mxu0 0
        %505 = vmatprep.subr.bf16.mxu0 0
        %506 = vmatpush1.bf16.msra.mxu0 0
        %507 = vmatprep.subr.bf16.mxu0 0
        %508 = vmatpush1.bf16.msra.mxu0 0
        %509 = vmatprep.subr.bf16.mxu0 0
        %510 = vmatpush1.bf16.msra.mxu0 %v400
        %511 = vmatprep.subr.bf16.mxu0 0
        %512 = vmatpush1.bf16.msra.mxu0 %v399
        %513 = vmatprep.subr.bf16.mxu0 0
        %514 = vmatpush2.bf16.msra.mxu0 0
        %515 = vmatprep.subr.bf16.mxu0 0
        %516 = vmatpush2.bf16.msra.mxu0 0
        %517 = vmatprep.subr.bf16.mxu0 0
        %518 = vmatpush2.bf16.msra.mxu0 0
        %519 = vmatprep.subr.bf16.mxu0 0
        %520 = vmatpush2.bf16.msra.mxu0 0
        %521 = vmatprep.subr.bf16.mxu0 0
        %522 = vmatpush2.bf16.msra.mxu0 0
        %523 = vmatprep.subr.bf16.mxu0 0
        %524 = vmatpush2.bf16.msra.mxu0 0
        %525 = vmatprep.subr.bf16.mxu0 0
        %526 = vmatpush2.bf16.msra.mxu0 0
        %527 = vmatprep.subr.bf16.mxu0 0
        %528 = vmatpush2.bf16.msra.mxu0 0
        %529 = vmatprep.mubr.bf16.mxu0 0
        %530 = vmatmul.mubr.bf16.gmra.mxu0 %v495
        %v531 = vpop.f32.mrf.mxu0
        %v532 = vadd.f32 0.0, %v531
        %v533 = vpop.f32.mrf.mxu0
        %v534 = vpop.f32.mrf.mxu0
        %v535 = vpop.f32.mrf.mxu0
        %536 = vdwg.mxu0
        %v537 = vmul.f32 %v446, 0.25
        %v538 = vpack.c.bf16 %v537, %v537
        %v539 = vpack.c.bf16 %v489, %v489
        %540 = vmatprep.subr.bf16.mxu0 0
        %541 = vmatpush1.bf16.xpose.msra.mxu0 0
        %542 = vmatprep.subr.bf16.mxu0 0
        %543 = vmatpush1.bf16.xpose.msra.mxu0 0
        %544 = vmatprep.subr.bf16.mxu0 0
        %545 = vmatpush1.bf16.xpose.msra.mxu0 0
        %546 = vmatprep.subr.bf16.mxu0 0
        %547 = vmatpush1.bf16.xpose.msra.mxu0 0
        %548 = vmatprep.subr.bf16.mxu0 0
        %549 = vmatpush1.bf16.xpose.msra.mxu0 0
        %550 = vmatprep.subr.bf16.mxu0 0
        %551 = vmatpush1.bf16.xpose.msra.mxu0 0
        %552 = vmatprep.subr.bf16.mxu0 0
        %553 = vmatpush1.bf16.xpose.msra.mxu0 0
        %554 = vmatprep.subr.bf16.mxu0 0
        %555 = vmatpush1.bf16.xpose.msra.mxu0 %v539
        %556 = vmatprep.subr.bf16.mxu0 0
        %557 = vmatpush2.bf16.xpose.msra.mxu0 0
        %558 = vmatprep.subr.bf16.mxu0 0
        %559 = vmatpush2.bf16.xpose.msra.mxu0 0
        %560 = vmatprep.subr.bf16.mxu0 0
        %561 = vmatpush2.bf16.xpose.msra.mxu0 0
        %562 = vmatprep.subr.bf16.mxu0 0
        %563 = vmatpush2.bf16.xpose.msra.mxu0 0
        %564 = vmatprep.subr.bf16.mxu0 0
        %565 = vmatpush2.bf16.xpose.msra.mxu0 0
        %566 = vmatprep.subr.bf16.mxu0 0
        %567 = vmatpush2.bf16.xpose.msra.mxu0 0
        %568 = vmatprep.subr.bf16.mxu0 0
        %569 = vmatpush2.bf16.xpose.msra.mxu0 0
        %570 = vmatprep.subr.bf16.mxu0 0
        %571 = vmatpush2.bf16.xpose.msra.mxu0 0
        %572 = vmatprep.mubr.bf16.mxu0 0
        %573 = vmatmul.mubr.bf16.gmra.mxu0 %v538
        %v574 = vpop.f32.mrf.mxu0
        %v575 = vadd.f32 0.0, %v574
        %v576 = vpop.f32.mrf.mxu0
        %v577 = vpop.f32.mrf.mxu0
        %v578 = vpop.f32.mrf.mxu0
        %579 = vdwg.mxu0
        %vm580 = vcmask 64512
        %v581 = vsel %vm580, %v575, -inf
        %582 = vmax.xlane.f32.xlu0 %v581
        %v583 = vpop.xlane.xlu0 %582
        %v584 = vsub.f32 %v575, %v583
        %v585 = vmul.f32 %v584, 1.442695
        %v586 = vpow.pop %v585
        %v587 = vsel %vm580, %v586, 0.0
        %588 = vadd.xlane.f32.xlu0 %v587
        %v589 = vpop.xlane.xlu0 %588
        %v590 = vpack.c.bf16 %v586, %v586
        %v591 = vpack.c.bf16 %v532, %v532
        %v593 = vsel %vm580, %v590, 0
        %vm595 = vcmask 1043456
        %v597 = vsel %vm595, %v591, 0
        %599 = vmatprep.subr.bf16.mxu0 0
        %600 = vmatpush1.bf16.msra.mxu0 0
        %601 = vmatprep.subr.bf16.mxu0 0
        %602 = vmatpush1.bf16.msra.mxu0 0
        %603 = vmatprep.subr.bf16.mxu0 0
        %604 = vmatpush1.bf16.msra.mxu0 0
        %605 = vmatprep.subr.bf16.mxu0 0
        %606 = vmatpush1.bf16.msra.mxu0 0
        %607 = vmatprep.subr.bf16.mxu0 0
        %608 = vmatpush1.bf16.msra.mxu0 0
        %609 = vmatprep.subr.bf16.mxu0 0
        %610 = vmatpush1.bf16.msra.mxu0 0
        %611 = vmatprep.subr.bf16.mxu0 0
        %612 = vmatpush1.bf16.msra.mxu0 0
        %613 = vmatprep.subr.bf16.mxu0 0
        %614 = vmatpush1.bf16.msra.mxu0 %v597
        %615 = vmatprep.subr.bf16.mxu0 0
        %616 = vmatpush2.bf16.msra.mxu0 0
        %617 = vmatprep.subr.bf16.mxu0 0
        %618 = vmatpush2.bf16.msra.mxu0 0
        %619 = vmatprep.subr.bf16.mxu0 0
        %620 = vmatpush2.bf16.msra.mxu0 0
        %621 = vmatprep.subr.bf16.mxu0 0
        %622 = vmatpush2.bf16.msra.mxu0 0
        %623 = vmatprep.subr.bf16.mxu0 0
        %624 = vmatpush2.bf16.msra.mxu0 0
        %625 = vmatprep.subr.bf16.mxu0 0
        %626 = vmatpush2.bf16.msra.mxu0 0
        %627 = vmatprep.subr.bf16.mxu0 0
        %628 = vmatpush2.bf16.msra.mxu0 0
        %629 = vmatprep.subr.bf16.mxu0 0
        %630 = vmatpush2.bf16.msra.mxu0 0
        %631 = vmatprep.mubr.bf16.mxu0 0
        %632 = vmatmul.mubr.bf16.gmra.mxu0 %v593
        %v633 = vpop.f32.mrf.mxu0
        %v634 = vadd.f32 0.0, %v633
        %v635 = vpop.f32.mrf.mxu0
        %v636 = vpop.f32.mrf.mxu0
        %v637 = vpop.f32.mrf.mxu0
        %638 = vdwg.mxu0
        %v639 = vrcp.pop %v589
        %v640 = vmul.f32 %v634, %v639
        %641 = vst [vmem:[%s381] sm:$0xff] %v640
        %s642 = sand.u32 %s177, 1
        %s643 = scalar_lea.sflag [#allocation4], %s642
        %s644 = sand.u32 %s177, 1
        %s645 = smul.addr %s644, 8
        %s646 = scalar_lea.vmem [#allocation13], %s645
        // Predicated region
        $region69: #{tpu_custom_call.1} parent=43 // pred_check
          %p647 = pneg %p187
        $region70: #{tpu_custom_call.1} parent=43 // pred_check_branch
          %649 = sbr.rel (%p647) target = $region72
        $region71: #{tpu_custom_call.1} parent=43 // pred_region
          %s651 = ssub.s32 128, 128
          %652 = vsyncadd %s643, %s651
          %s653 = smul.addr %s28, 128
          %s654 = scalar_lea.hbm %s6, %s653
          %s656 = sshll.u32 %s646, 4
          %s657 = int_to_ptr.vmem [resolvable:$true] %s656
          %659 = dma.vmem_to_hbm [thread:$0]  %s657, 128, %s654, %s643
        $region72: #{tpu_custom_call.1} parent=43 // pred_fallthru
          _
      $region44: #{tpu_custom_call.1} parent=5 // pred_fallthru
        _
      %p660 = scmp.le.s32.totalorder 2, %s23
      // Predicated region
      $region73: #{tpu_custom_call.1} parent=5 // pred_check
        %p661 = pneg %p660
      $region74: #{tpu_custom_call.1} parent=5 // pred_check_branch
        %663 = sbr.rel (%p661) target = $region76
      $region75: #{tpu_custom_call.1} parent=5 // pred_region
        %s664 = ssub.s32 %s23, 2
        // Predicated region
        $region77: #{tpu_custom_call.1} parent=75 // pred_check
          %p665 = pneg %p193
        $region78: #{tpu_custom_call.1} parent=75 // pred_check_branch
          %667 = sbr.rel (%p665) target = $region80
        $region79: #{tpu_custom_call.1} parent=75 // pred_region
          %s668 = sand.u32 %s178, 1
          %s669 = scalar_lea.sflag [#allocation4], %s668
          %s670 = sand.u32 %s178, 1
          %s671 = smul.addr %s670, 8
          %s672 = scalar_lea.vmem [#allocation13], %s671
          %673 = dma.done %s669, 128
        $region80: #{tpu_custom_call.1} parent=75 // pred_fallthru
          _
      $region76: #{tpu_custom_call.1} parent=5 // pred_fallthru
        _
    $region6: #{tpu_custom_call.1} parent=1 // loop_footer
      %s27 = sadd.s32 1, %s23
    $region7: #{tpu_custom_call.1} parent=1 // loop_footer_branch
      %22 = sbr.rel target = $region3
    $region8: #{tpu_custom_call.1} parent=1 // loop_exit
      _
    %674 = vsyncpa [#allocation3], 1
    %s675 = scalar_lea.sflag [#allocation3], 1
    %676 = vsyncpa %s675, 1
    %677 = vsyncpa [#allocation6], 1
    %s678 = scalar_lea.sflag [#allocation6], 1
    %679 = vsyncpa %s678, 1
    %680 = vsyncpa [#allocation9], 1
    %681 = vsyncpa [#allocation12], 1
    %682 = vsyncpa [#allocation4], 1
    %s683 = scalar_lea.sflag [#allocation4], 1
    %684 = vsyncpa %s683, 1

</llo_original>
